<compile_context>
chip_gen: v7x
topology: tpu7x:2x2x1
jax: 0.10.0
libtpu: 0.0.40
codegen_flags: <defaults>
</compile_context>

<pallas_src>
import functools

import numpy as np
import jax
import jax.numpy as jnp
from jax import lax
from jax.experimental import pallas as pl
from jax.experimental.pallas import tpu as pltpu


def _distance_mask_kernel(*refs, n, n_pad, tm, cutoff_lower, cutoff_upper,
                          max_num_neighbors, loop, need_cap, use_cross):
    """Writes the dense int8 adjacency mask for one (TM, N_pad) row tile."""
    if use_cross:
        (pos_col_ref, pos_row_ref, batch_col_ref, batch_row_ref,
         blk_ref, tri_ref, blkT_ref, mask_ref) = refs
    else:
        (pos_col_ref, pos_row_ref, batch_col_ref, batch_row_ref,
         mask_ref) = refs

    pos_col = pos_col_ref[...]            # (TM, 3)    f32 — rows of this tile
    pos_row = pos_row_ref[...]            # (3, N_pad) f32 — all columns
    batch_col = batch_col_ref[...]        # (TM, 1)    i32
    batch_row = batch_row_ref[...]        # (1, N_pad) i32

    # Per-coordinate pairwise differences as (TM, N_pad) lane-dense planes.
    dx = pos_col[:, 0:1] - pos_row[0:1, :]
    dy = pos_col[:, 1:2] - pos_row[1:2, :]
    dz = pos_col[:, 2:3] - pos_row[2:3, :]
    d2 = dx * dx + dy * dy + dz * dz      # squared distance: no sqrt needed

    mask = (batch_col == batch_row) & (d2 < cutoff_upper * cutoff_upper)

    if need_cap or (not loop):
        jj = lax.broadcasted_iota(jnp.int32, (tm, n_pad), 1)   # global col id

    if not loop:
        # diagonal removal via a (TM, 1) row-iota broadcast (no full ii plane)
        row0 = pl.program_id(0) * tm
        li = lax.broadcasted_iota(jnp.int32, (tm, 1), 0) + row0
        mask = mask & (jj != li)

    if need_cap:
        # radius_graph caps neighbors per query node: keep the first
        # `max_num_neighbors` (lowest column index) neighbors per row.
        # Two-level inclusive prefix count along lanes:
        #   level 1: roll+add within each 128-lane block (guard keeps sources
        #            in the same block, also blocking padded-column wrap),
        #   level 2: exclusive prefix over per-block totals via 3 tiny MXU
        #            matmuls (only when n > 128).
        cnt0 = mask.astype(jnp.int32)
        cnt = cnt0
        jj_mod = jnp.bitwise_and(jj, 127)
        intra_steps = max(0, (min(n, 128) - 1).bit_length())
        shift = 1
        for _ in range(intra_steps):
            rolled = pltpu.roll(cnt, shift=shift, axis=1)   # out[j] = in[j-shift]
            cnt = cnt + jnp.where(jj_mod >= shift, rolled, 0)
            shift *= 2
        if use_cross:
            cnt0f = cnt0.astype(jnp.float32)
            totals = jnp.dot(cnt0f, blk_ref[...],           # (TM, NBP) block sums
                             preferred_element_type=jnp.float32)
            excl = jnp.dot(totals, tri_ref[...],            # (TM, NBP) excl prefix
                           preferred_element_type=jnp.float32)
            cross = jnp.dot(excl, blkT_ref[...],            # broadcast back
                            preferred_element_type=jnp.float32)
            cnt = cnt + cross.astype(jnp.int32)
        mask = mask & (cnt <= max_num_neighbors)

    # lower-cutoff filter (after the cap, matching the torch module); skipped
    # statically for the common cutoff_lower == 0 case.
    if cutoff_lower > 0.0:
        mask = mask & (d2 >= cutoff_lower * cutoff_lower)

    # int8 output: 4x less HBM writeback than int32.  (Two-step cast keeps the
    # conversions on proven i1->i32 / i32->i8 lowering paths.)
    mask_ref[...] = mask.astype(jnp.int32).astype(jnp.int8)


def distance_pallas(pos, batch, *, cutoff_lower, cutoff_upper,
                    max_num_neighbors=32, loop=False, return_vecs=False):
    """Pallas equivalent of TorchMD-Net Distance.forward(pos, batch).

    Returns (edge_index (2, E_max) i32 with -1 padding,
             edge_weight (E_max,) f32 with 0 padding,
             edge_vec (E_max, 3) f32 or None).
    """
    n = int(pos.shape[0])
    pos_f32 = pos.astype(jnp.float32)
    batch_i32 = batch.astype(jnp.int32)

    # Pad the atom dimension to a lane-dense multiple of 128.
    n_pad = max(((n + 127) // 128) * 128, 128)

    max_possible = n if loop else max(n - 1, 0)
    need_cap = int(max_num_neighbors) < max_possible
    use_cross = bool(need_cap and n > 128)

    # VMEM budget from device info (v5e/v6e: 128 MiB, v7x: 64 MiB per TC).
    try:
        vmem_cap = int(pltpu.get_tpu_info().vmem_capacity_bytes)
    except Exception:
        vmem_cap = 64 * 1024 * 1024
    vmem_limit = max(32 * 1024 * 1024, min(vmem_cap * 3 // 4, 100 * 1024 * 1024))

    # Row tile: lane-dense 128 by default, but guarantee >= 2 grid steps so the
    # "parallel" row axis actually shards across v7x's two TensorCores, and
    # shrink only if ~8 live (TM, N_pad) i32/f32 planes would blow the budget.
    tm = 128
    if n_pad // tm < 2:
        tm = max(32, n_pad // 2)
    while tm > 32 and tm * n_pad * 4 * 8 > max(vmem_limit // 2, 8 * 1024 * 1024):
        tm //= 2
    grid = (n_pad // tm,)

    pos_pad = jnp.zeros((n_pad, 3), jnp.float32).at[:n].set(pos_f32)
    batch_pad = jnp.zeros((n_pad,), jnp.int32).at[:n].set(batch_i32)

    operands = [pos_pad,                       # (N_pad, 3)  rows of each tile
                pos_pad.T,                     # (3, N_pad)  all columns
                batch_pad.reshape(n_pad, 1),   # (N_pad, 1)
                batch_pad.reshape(1, n_pad)]   # (1, N_pad)
    in_specs = [
        pl.BlockSpec((tm, 3), lambda i: (i, 0)),
        pl.BlockSpec((3, n_pad), lambda i: (0, 0)),
        pl.BlockSpec((tm, 1), lambda i: (i, 0)),
        pl.BlockSpec((1, n_pad), lambda i: (0, 0)),
    ]

    nbp = 0
    if use_cross:
        # Constant matrices for the cross-block prefix (values are 0/1, exact
        # in f32; counts stay well below 2^24 so f32 accumulation is exact).
        n_blocks = n_pad // 128
        nbp = ((n_blocks + 127) // 128) * 128
        jb = np.arange(n_pad) // 128
        blk = (jb[:, None] == np.arange(nbp)[None, :]).astype(np.float32)   # (N_pad, NBP)
        tri = (np.arange(nbp)[:, None]
               < np.arange(nbp)[None, :]).astype(np.float32)                # (NBP, NBP)
        operands += [jnp.asarray(blk), jnp.asarray(tri), jnp.asarray(blk.T.copy())]
        in_specs += [
            pl.BlockSpec((n_pad, nbp), lambda i: (0, 0)),
            pl.BlockSpec((nbp, nbp), lambda i: (0, 0)),
            pl.BlockSpec((nbp, n_pad), lambda i: (0, 0)),
        ]

    kernel = functools.partial(
        _distance_mask_kernel,
        n=n, n_pad=int(n_pad), tm=int(tm),
        cutoff_lower=float(cutoff_lower), cutoff_upper=float(cutoff_upper),
        max_num_neighbors=int(max_num_neighbors),
        loop=bool(loop), need_cap=bool(need_cap), use_cross=use_cross)

    intra_steps = (max(0, (min(n, 128) - 1).bit_length()) if need_cap else 0)
    mm_flops = (2 * n_pad * nbp * (2 * n_pad + nbp)) if use_cross else 0
    cost = pl.CostEstimate(
        flops=int(n_pad * n_pad * (10 + 4 * intra_steps) + mm_flops),
        transcendentals=0,                          # sqrt eliminated
        bytes_accessed=int(2 * n_pad * 3 * 4 + 2 * n_pad * 4
                           + (4 * (2 * n_pad * nbp + nbp * nbp) if use_cross else 0)
                           + n_pad * n_pad),
    )

    mask_full = pl.pallas_call(
        kernel,
        out_shape=jax.ShapeDtypeStruct((n_pad, n_pad), jnp.int8),
        grid=grid,
        in_specs=in_specs,
        out_specs=pl.BlockSpec((tm, n_pad), lambda i: (i, 0)),
        compiler_params=pltpu.CompilerParams(
            dimension_semantics=("parallel",),
            vmem_limit_bytes=int(vmem_limit),
        ),
        cost_estimate=cost,
    )(*operands)

    # ---- plain-JAX glue: dense int8 mask -> padded edge list ----------------
    # Per-row cumsum gives each edge a slot; a single scatter builds an
    # (N, k_nn) neighbor table (no jnp.nonzero / O(N^2) sort).  Edge padding is
    # marked with -1 in both rows of edge_index.
    # TODO(synk): for very large N, compact in-kernel to an (N, max_nn)
    # neighbor table to also avoid the dense N^2 int8 writeback.
    m = mask_full[:n, :n] != 0
    k_nn = max(1, min(int(max_num_neighbors), n))
    slot = jnp.cumsum(m.astype(jnp.int32), axis=1) - 1
    cols = jnp.broadcast_to(jnp.arange(n, dtype=jnp.int32)[None, :], (n, n))
    rows = jnp.broadcast_to(jnp.arange(n, dtype=jnp.int32)[:, None], (n, n))
    slot_safe = jnp.where(m, jnp.clip(slot, 0, k_nn - 1), k_nn)   # invalid -> dump col
    vals = jnp.where(m, cols, -1)
    nbr = jnp.full((n, k_nn + 1), -1, jnp.int32)
    nbr = nbr.at[rows, slot_safe].set(vals)[:, :k_nn]             # (n, k_nn)

    src = jnp.repeat(jnp.arange(n, dtype=jnp.int32), k_nn)        # (n*k_nn,)
    dst = nbr.reshape(-1)
    valid = dst >= 0
    dst_safe = jnp.where(valid, dst, 0)
    edge_index = jnp.stack([jnp.where(valid, src, -1), dst], axis=0).astype(jnp.int32)

    # Recompute edge_vec / edge_weight from the compacted edge list (no dense
    # f32 N^2 planes ever leave the kernel).
    vec = pos_f32[src] - pos_f32[dst_safe]
    vec = jnp.where(valid[:, None], vec, 0.0)
    edge_weight = jnp.where(valid, jnp.sqrt(jnp.sum(vec * vec, axis=-1)), 0.0)

    if return_vecs:
        return edge_index, edge_weight, vec
    return edge_index, edge_weight, None


def _np_reference_mask(pos_np, batch_np, cutoff_lower, cutoff_upper, loop=False):
    diff = pos_np[:, None, :].astype(np.float64) - pos_np[None, :, :].astype(np.float64)
    d = np.sqrt((diff * diff).sum(-1))
    n = pos_np.shape[0]
    mask = (batch_np[:, None] == batch_np[None, :]) & (d < cutoff_upper)
    if not loop:
        idx = np.arange(n)
        mask &= idx[:, None] != idx[None, :]
    mask &= d >= cutoff_lower
    return mask, d


def _np_capped_mask(mask_ref, max_nn):
    out = np.zeros_like(mask_ref)
    for i in range(mask_ref.shape[0]):
        cols_i = np.nonzero(mask_ref[i])[0]
        out[i, cols_i[:max_nn]] = True
    return out


if __name__ == "__main__":
    key = jax.random.PRNGKey(0)
    k_pos, k_pos3 = jax.random.split(key)

    # ---------------- test 1: small, cap not binding (scan skipped) ----------
    n_atoms = 16
    cutoff_lower, cutoff_upper = 0.0, 5.0
    pos = jax.random.normal(k_pos, (n_atoms, 3), dtype=jnp.float32) * 2.0
    batch = jnp.repeat(jnp.arange(2, dtype=jnp.int32), n_atoms // 2)

    edge_index, edge_weight, edge_vec = distance_pallas(
        pos, batch, cutoff_lower=cutoff_lower, cutoff_upper=cutoff_upper,
        max_num_neighbors=32, loop=False, return_vecs=True)
    jax.block_until_ready((edge_index, edge_weight, edge_vec))

    pos_np = np.asarray(pos)
    batch_np = np.asarray(batch)
    mask_ref, d_ref = _np_reference_mask(pos_np, batch_np, cutoff_lower, cutoff_upper)

    ei = np.asarray(edge_index)
    ew = np.asarray(edge_weight)
    ev = np.asarray(edge_vec)
    valid = ei[0] >= 0
    assert int(valid.sum()) == int(mask_ref.sum()), "edge count mismatch"
    s, t = ei[0][valid], ei[1][valid]
    got = np.zeros_like(mask_ref)
    got[s, t] = True
    assert np.array_equal(got, mask_ref), "edge set mismatch"
    np.testing.assert_allclose(ew[valid], d_ref[s, t], rtol=1e-5, atol=1e-5)
    np.testing.assert_allclose(ev[valid], pos_np[s] - pos_np[t], rtol=1e-5, atol=1e-5)

    # ---------------- test 2: neighbor cap (intra-block scan only) -----------
    ei4, ew4, _ = distance_pallas(
        pos, batch, cutoff_lower=cutoff_lower, cutoff_upper=cutoff_upper,
        max_num_neighbors=4, loop=False, return_vecs=False)
    jax.block_until_ready((ei4, ew4))
    ei4 = np.asarray(ei4)
    valid4 = ei4[0] >= 0
    s4, t4 = ei4[0][valid4], ei4[1][valid4]
    got4 = np.zeros_like(mask_ref)
    got4[s4, t4] = True
    exp4 = _np_capped_mask(mask_ref, 4)
    assert np.array_equal(got4, exp4), "capped edge set mismatch (n<=128 path)"

    # ---------------- test 3: n > 128 exercises the cross-block MXU path -----
    n3 = 300
    cu3 = 1.0
    pos3 = jax.random.uniform(k_pos3, (n3, 3), dtype=jnp.float32) * 3.0
    batch3 = jnp.repeat(jnp.arange(2, dtype=jnp.int32), n3 // 2)
    max_nn3 = 8

    ei3, ew3, ev3 = distance_pallas(
        pos3, batch3, cutoff_lower=0.0, cutoff_upper=cu3,
        max_num_neighbors=max_nn3, loop=False, return_vecs=True)
    jax.block_until_ready((ei3, ew3, ev3))

    pos3_np = np.asarray(pos3)
    batch3_np = np.asarray(batch3)
    mask3_ref, d3_ref = _np_reference_mask(pos3_np, batch3_np, 0.0, cu3)
    exp3 = _np_capped_mask(mask3_ref, max_nn3)

    ei3 = np.asarray(ei3)
    ew3 = np.asarray(ew3)
    valid3 = ei3[0] >= 0
    s3, t3 = ei3[0][valid3], ei3[1][valid3]
    got3 = np.zeros_like(mask3_ref)
    got3[s3, t3] = True

    # exact per-row comparison only on rows with no pair sitting numerically on
    # the cutoff boundary (f32 vs f64 rounding could flip those ties).
    boundary = np.abs(d3_ref * d3_ref - cu3 * cu3) < 1e-4
    safe_rows = ~boundary.any(axis=1)
    assert np.array_equal(got3[safe_rows], exp3[safe_rows]), \
        "capped edge set mismatch (n>128 cross-block path)"
    # loose checks for all rows: in-radius(+eps), same batch, no diagonal, cap.
    assert np.all(d3_ref[s3, t3] < cu3 + 1e-3), "spurious far edges"
    assert np.all(batch3_np[s3] == batch3_np[t3]), "cross-batch edges"
    assert np.all(s3 != t3), "self loops"
    assert np.all(np.bincount(s3, minlength=n3) <= max_nn3), "cap exceeded"
    np.testing.assert_allclose(ew3[valid3], d3_ref[s3, t3], rtol=1e-4, atol=1e-4)

    print("KERNEL_OK")
</pallas_src>

<mosaic_0001>
module attributes {stable_mosaic.version = 11 : i64} {
  func.func @_distance_mask_kernel(%arg0: i32, %arg1: memref<64x3xf32, #tpu.memory_space<vmem>>, %arg2: memref<3x128xf32, #tpu.memory_space<vmem>>, %arg3: memref<64x1xi32, #tpu.memory_space<vmem>>, %arg4: memref<1x128xi32, #tpu.memory_space<vmem>>, %arg5: memref<64x128xi8, #tpu.memory_space<vmem>>) attributes {dimension_semantics = [#tpu.dimension_semantics<parallel>], iteration_bounds = array<i64: 2>, scalar_prefetch = 0 : i64, scratch_operands = 0 : i64, tpu.core_type = #tpu.core_type<tc>, window_params = [{transform_indices = @transform_0, window_bounds = array<i64: 64, 3>}, {pipeline_mode = #tpu.pipeline_mode<synchronous>, transform_indices = @transform_1, window_bounds = array<i64: 3, 128>}, {transform_indices = @transform_2, window_bounds = array<i64: 64, 1>}, {pipeline_mode = #tpu.pipeline_mode<synchronous>, transform_indices = @transform_3, window_bounds = array<i64: 1, 128>}, {transform_indices = @transform_4, window_bounds = array<i64: 64, 128>}]} {
    %c0 = arith.constant 0 : index
    %c0_0 = arith.constant 0 : index
    %0 = vector.load %arg1[%c0, %c0_0] : memref<64x3xf32, #tpu.memory_space<vmem>>, vector<64x3xf32>
    %c0_1 = arith.constant 0 : index
    %c0_2 = arith.constant 0 : index
    %1 = vector.load %arg2[%c0_1, %c0_2] : memref<3x128xf32, #tpu.memory_space<vmem>>, vector<3x128xf32>
    %c0_3 = arith.constant 0 : index
    %c0_4 = arith.constant 0 : index
    %2 = vector.load %arg3[%c0_3, %c0_4] : memref<64x1xi32, #tpu.memory_space<vmem>>, vector<64x1xi32>
    %c0_5 = arith.constant 0 : index
    %c0_6 = arith.constant 0 : index
    %3 = vector.load %arg4[%c0_5, %c0_6] : memref<1x128xi32, #tpu.memory_space<vmem>>, vector<1x128xi32>
    %4 = vector.extract_strided_slice %0 {offsets = [0, 0], sizes = [64, 1], strides = [1, 1]} : vector<64x3xf32> to vector<64x1xf32>
    %5 = vector.extract_strided_slice %1 {offsets = [0, 0], sizes = [1, 128], strides = [1, 1]} : vector<3x128xf32> to vector<1x128xf32>
    %6 = vector.broadcast %4 : vector<64x1xf32> to vector<64x128xf32>
    %7 = vector.broadcast %5 : vector<1x128xf32> to vector<64x128xf32>
    %8 = arith.subf %6, %7 : vector<64x128xf32>
    %9 = vector.extract_strided_slice %0 {offsets = [0, 1], sizes = [64, 1], strides = [1, 1]} : vector<64x3xf32> to vector<64x1xf32>
    %10 = vector.extract_strided_slice %1 {offsets = [1, 0], sizes = [1, 128], strides = [1, 1]} : vector<3x128xf32> to vector<1x128xf32>
    %11 = vector.broadcast %9 : vector<64x1xf32> to vector<64x128xf32>
    %12 = vector.broadcast %10 : vector<1x128xf32> to vector<64x128xf32>
    %13 = arith.subf %11, %12 : vector<64x128xf32>
    %14 = vector.extract_strided_slice %0 {offsets = [0, 2], sizes = [64, 1], strides = [1, 1]} : vector<64x3xf32> to vector<64x1xf32>
    %15 = vector.extract_strided_slice %1 {offsets = [2, 0], sizes = [1, 128], strides = [1, 1]} : vector<3x128xf32> to vector<1x128xf32>
    %16 = vector.broadcast %14 : vector<64x1xf32> to vector<64x128xf32>
    %17 = vector.broadcast %15 : vector<1x128xf32> to vector<64x128xf32>
    %18 = arith.subf %16, %17 : vector<64x128xf32>
    %19 = arith.mulf %8, %8 : vector<64x128xf32>
    %20 = arith.mulf %13, %13 : vector<64x128xf32>
    %21 = arith.addf %19, %20 : vector<64x128xf32>
    %22 = arith.mulf %18, %18 : vector<64x128xf32>
    %23 = arith.addf %21, %22 : vector<64x128xf32>
    %24 = vector.broadcast %2 : vector<64x1xi32> to vector<64x128xi32>
    %25 = vector.broadcast %3 : vector<1x128xi32> to vector<64x128xi32>
    %26 = arith.cmpi eq, %24, %25 : vector<64x128xi32>
    %cst = arith.constant 2.500000e+01 : f32
    %27 = vector.broadcast %cst : f32 to vector<64x128xf32>
    %28 = arith.cmpf olt, %23, %27 : vector<64x128xf32>
    %29 = arith.andi %26, %28 : vector<64x128xi1>
    %30 = tpu.iota {dimensions = array<i32: 1>} : vector<64x128xi32>
    %c64_i32 = arith.constant 64 : i32
    %31 = arith.muli %arg0, %c64_i32 : i32
    %32 = tpu.iota {dimensions = array<i32: 0>} : vector<64x1xi32>
    %33 = vector.broadcast %31 : i32 to vector<64x1xi32>
    %34 = arith.addi %32, %33 : vector<64x1xi32>
    %35 = vector.broadcast %34 : vector<64x1xi32> to vector<64x128xi32>
    %36 = arith.cmpi ne, %30, %35 : vector<64x128xi32>
    %37 = arith.andi %29, %36 : vector<64x128xi1>
    %38 = arith.extui %37 : vector<64x128xi1> to vector<64x128xi32>
    %39 = arith.trunci %38 : vector<64x128xi32> to vector<64x128xi8>
    %c0_7 = arith.constant 0 : index
    %c0_8 = arith.constant 0 : index
    %40 = vector.load %arg5[%c0_7, %c0_8] : memref<64x128xi8, #tpu.memory_space<vmem>>, vector<64x128xi8>
    tpu.vector_store %arg5[%c0_7, %c0_8], %39 {strides = array<i32>} : memref<64x128xi8, #tpu.memory_space<vmem>>, vector<64x128xi8>,
    return
  }
  func.func @transform_0(%arg0: i32) -> (i32, i32) {
    %c0_i32 = arith.constant 0 : i32
    %c0_i32_0 = arith.constant 0 : i32
    return %arg0, %c0_i32 : i32, i32
  }
  func.func @transform_1(%arg0: i32) -> (i32, i32) {
    %c0_i32 = arith.constant 0 : i32
    %c0_i32_0 = arith.constant 0 : i32
    %c0_i32_1 = arith.constant 0 : i32
    return %c0_i32, %c0_i32_0 : i32, i32
  }
  func.func @transform_2(%arg0: i32) -> (i32, i32) {
    %c0_i32 = arith.constant 0 : i32
    %c0_i32_0 = arith.constant 0 : i32
    return %arg0, %c0_i32 : i32, i32
  }
  func.func @transform_3(%arg0: i32) -> (i32, i32) {
    %c0_i32 = arith.constant 0 : i32
    %c0_i32_0 = arith.constant 0 : i32
    %c0_i32_1 = arith.constant 0 : i32
    return %c0_i32, %c0_i32_0 : i32, i32
  }
  func.func @transform_4(%arg0: i32) -> (i32, i32) {
    %c0_i32 = arith.constant 0 : i32
    %c0_i32_0 = arith.constant 0 : i32
    return %arg0, %c0_i32 : i32, i32
  }
}

</mosaic_0001>

<llo_original>
// kernel: tpu_custom_call.1
$region0: #{tpu_custom_call.1}
  #allocation0 [shape = 'u32[]', space=smem, size = 0x4, offset = 0x4, fixed_abs, tag = 'smem constant byte address 0x4 - core index']
  #allocation1 [shape = 'u32[144,128]{1,0:T(1,128)}', space=vmem, size = 0x12000, scoped, tag = 'internal scratch']
  %s0 = inlined_call_operand.vmem [shape: f32[128,3], index: 0, kind: input, shape index: {}]
  %s1 = inlined_call_operand.vmem [shape: f32[3,128], index: 1, kind: input, shape index: {}]
  %s2 = inlined_call_operand.vmem [shape: s32[128,1], index: 2, kind: input, shape index: {}]
  %s3 = inlined_call_operand.vmem [shape: s32[1,128], index: 3, kind: input, shape index: {}]
  %s4 = inlined_call_operand.hbm [shape: s8[128,128], index: 4, kind: output, shape index: {}]
  %s5 = sld [smem:[#allocation0]]
  $region49: #{tpu_custom_call.1} parent=0
    _
  %s7 = ssub.s32 1, %s5
  %s8 = scalar_select 0, %s7, %s5
  $region1: #{tpu_custom_call.1} parent=0
    #allocation2 [shape = 'u8[16384]{0}', space=vmem, size = 0x4000, scoped, tag = 'output window, operand 0']
    #allocation3 [shape = 's32[2]{0}', space=sflag, size = 0x8, scoped, tag = 'scoped memory for tpu_custom_call.1']
    %9 = vsyncpa [#allocation3], 0
    %s10 = scalar_lea.sflag [#allocation3], 1
    %11 = vsyncpa %s10, 0
    loop: start=0, step=1, limit=4
    $region2: #{tpu_custom_call.1} parent=1 // loop_pre_header
      _
    $region3: #{tpu_custom_call.1} parent=1 // loop_header
      %s13 = sphi 0, %s17
      %p14 = scmp.ge.s32.totalorder %s13, 4
      %s23 = sphi 0, %s25
      %s26 = sphi 0, %s23
      %s27 = sphi 0, %s26
      %s43 = sphi 0, %s27
      %s47 = sphi 0, %s47
      %s49 = sphi 0, %s47
      %s50 = sphi 0, %s49
      %s64 = sphi 0, %s50
      %s70 = sphi 0, %s72
      %s73 = sphi 0, %s70
      %s74 = sphi 0, %s73
      %s90 = sphi 0, %s74
      %s94 = sphi 0, %s94
      %s96 = sphi 0, %s94
      %s97 = sphi 0, %s96
      %s111 = sphi 0, %s97
      %s117 = sphi 0, %s119
      %s120 = sphi 0, %s117
      %s121 = sphi 0, %s120
      %s137 = sphi 0, %s121
    $region4: #{tpu_custom_call.1} parent=1 // loop_header_branch
      %16 = sbr.rel (%p14) target = $region8
    $region5: #{tpu_custom_call.1} parent=1 // loop_body
      %s18 = ssub.s32 %s13, 1
      %s19 = ssub.s32 %s13, 2
      %s20 = sadd.s32 %s13, 1
      %s21 = ssub.s32 %s13, %s20
      %p22 = scmp.eq.s32.totalorder %s21, 0
      %s24 = sadd.s32 %s23, 1
      %s25 = scalar_select %p22, %s23, %s24
      %p28 = pneg %p22
      %p29 = scmp.eq.s32.totalorder %s13, 1
      %p30 = por %p28, %p29
      %p31 = scmp.ne.s32.totalorder %s23, %s26
      %p32 = scmp.eq.s32.totalorder %s13, 0
      %p33 = por %p31, %p32
      %p34 = scmp.ne.s32.totalorder %s23, %s26
      %p35 = scmp.eq.s32.totalorder %s18, 1
      %p36 = por %p34, %p35
      %p37 = scmp.ne.s32.totalorder %s26, %s27
      %p38 = scmp.eq.s32.totalorder %s18, 0
      %p39 = por %p37, %p38
      %p40 = scmp.ne.s32.totalorder %s26, %s27
      %p41 = scmp.eq.s32.totalorder %s19, 1
      %p42 = por %p40, %p41
      %p44 = scmp.ne.s32.totalorder %s27, %s43
      %p45 = scmp.eq.s32.totalorder %s19, 0
      %p46 = por %p44, %p45
      %s48 = sadd.s32 %s47, 1
      %p51 = scmp.eq.s32.totalorder %s13, 1
      %p52 = scmp.ne.s32.totalorder %s47, %s49
      %p53 = scmp.eq.s32.totalorder %s13, 0
      %p54 = por %p52, %p53
      %p55 = scmp.ne.s32.totalorder %s47, %s49
      %p56 = scmp.eq.s32.totalorder %s18, 1
      %p57 = por %p55, %p56
      %p58 = scmp.ne.s32.totalorder %s49, %s50
      %p59 = scmp.eq.s32.totalorder %s18, 0
      %p60 = por %p58, %p59
      %p61 = scmp.ne.s32.totalorder %s49, %s50
      %p62 = scmp.eq.s32.totalorder %s19, 1
      %p63 = por %p61, %p62
      %p65 = scmp.ne.s32.totalorder %s50, %s64
      %p66 = scmp.eq.s32.totalorder %s19, 0
      %p67 = por %p65, %p66
      %s68 = ssub.s32 %s13, %s20
      %p69 = scmp.eq.s32.totalorder %s68, 0
      %s71 = sadd.s32 %s70, 1
      %s72 = scalar_select %p69, %s70, %s71
      %p75 = pneg %p69
      %p76 = scmp.eq.s32.totalorder %s13, 1
      %p77 = por %p75, %p76
      %p78 = scmp.ne.s32.totalorder %s70, %s73
      %p79 = scmp.eq.s32.totalorder %s13, 0
      %p80 = por %p78, %p79
      %p81 = scmp.ne.s32.totalorder %s70, %s73
      %p82 = scmp.eq.s32.totalorder %s18, 1
      %p83 = por %p81, %p82
      %p84 = scmp.ne.s32.totalorder %s73, %s74
      %p85 = scmp.eq.s32.totalorder %s18, 0
      %p86 = por %p84, %p85
      %p87 = scmp.ne.s32.totalorder %s73, %s74
      %p88 = scmp.eq.s32.totalorder %s19, 1
      %p89 = por %p87, %p88
      %p91 = scmp.ne.s32.totalorder %s74, %s90
      %p92 = scmp.eq.s32.totalorder %s19, 0
      %p93 = por %p91, %p92
      %s95 = sadd.s32 %s94, 1
      %p98 = scmp.eq.s32.totalorder %s13, 1
      %p99 = scmp.ne.s32.totalorder %s94, %s96
      %p100 = scmp.eq.s32.totalorder %s13, 0
      %p101 = por %p99, %p100
      %p102 = scmp.ne.s32.totalorder %s94, %s96
      %p103 = scmp.eq.s32.totalorder %s18, 1
      %p104 = por %p102, %p103
      %p105 = scmp.ne.s32.totalorder %s96, %s97
      %p106 = scmp.eq.s32.totalorder %s18, 0
      %p107 = por %p105, %p106
      %p108 = scmp.ne.s32.totalorder %s96, %s97
      %p109 = scmp.eq.s32.totalorder %s19, 1
      %p110 = por %p108, %p109
      %p112 = scmp.ne.s32.totalorder %s97, %s111
      %p113 = scmp.eq.s32.totalorder %s19, 0
      %p114 = por %p112, %p113
      %s115 = ssub.s32 %s13, %s20
      %p116 = scmp.eq.s32.totalorder %s115, 0
      %s118 = sadd.s32 %s117, 1
      %s119 = scalar_select %p116, %s117, %s118
      %p122 = pneg %p116
      %p123 = scmp.eq.s32.totalorder %s13, 1
      %p124 = por %p122, %p123
      %p125 = scmp.ne.s32.totalorder %s117, %s120
      %p126 = scmp.eq.s32.totalorder %s13, 0
      %p127 = por %p125, %p126
      %p128 = scmp.ne.s32.totalorder %s117, %s120
      %p129 = scmp.eq.s32.totalorder %s18, 1
      %p130 = por %p128, %p129
      %p131 = scmp.ne.s32.totalorder %s120, %s121
      %p132 = scmp.eq.s32.totalorder %s18, 0
      %p133 = por %p131, %p132
      %p134 = scmp.ne.s32.totalorder %s120, %s121
      %p135 = scmp.eq.s32.totalorder %s19, 1
      %p136 = por %p134, %p135
      %p138 = scmp.ne.s32.totalorder %s121, %s137
      %p139 = scmp.eq.s32.totalorder %s19, 0
      %p140 = por %p138, %p139
      %p141 = scmp.le.s32.totalorder 1, %s13
      %p142 = scmp.lt.s32.totalorder %s13, 3
      %p143 = pnand %p141, %p142
      %p144 = pneg %p143
      // Predicated region
      $region9: #{tpu_custom_call.1} parent=5 // pred_check
        _
      $region10: #{tpu_custom_call.1} parent=5 // pred_check_branch
        %146 = sbr.rel (%p143) target = $region12
      $region11: #{tpu_custom_call.1} parent=5 // pred_region
        %s147 = ssub.s32 %s13, 1
        // Predicated region
        $region13: #{tpu_custom_call.1} parent=11 // pred_check
          %p148 = pneg %p60
        $region14: #{tpu_custom_call.1} parent=11 // pred_check_branch
          %150 = sbr.rel (%p148) target = $region16
        $region15: #{tpu_custom_call.1} parent=11 // pred_region
          _
        $region16: #{tpu_custom_call.1} parent=11 // pred_fallthru
          _
        // Predicated region
        $region17: #{tpu_custom_call.1} parent=11 // pred_check
          %p151 = pneg %p107
        $region18: #{tpu_custom_call.1} parent=11 // pred_check_branch
          %153 = sbr.rel (%p151) target = $region20
        $region19: #{tpu_custom_call.1} parent=11 // pred_region
          _
        $region20: #{tpu_custom_call.1} parent=11 // pred_fallthru
          _
      $region12: #{tpu_custom_call.1} parent=5 // pred_fallthru
        _
      %p154 = scmp.lt.s32.totalorder %s13, 2
      // Predicated region
      $region21: #{tpu_custom_call.1} parent=5 // pred_check
        %p155 = pneg %p154
      $region22: #{tpu_custom_call.1} parent=5 // pred_check_branch
        %157 = sbr.rel (%p155) target = $region24
      $region23: #{tpu_custom_call.1} parent=5 // pred_region
        // Predicated region
        $region25: #{tpu_custom_call.1} parent=23 // pred_check
          %p158 = pneg %p33
        $region26: #{tpu_custom_call.1} parent=23 // pred_check_branch
          %160 = sbr.rel (%p158) target = $region28
        $region27: #{tpu_custom_call.1} parent=23 // pred_region
          %s161 = smul.u32 8, %s13
          %p162 = scmp.lt.s32.totalorder %s161, 15
          %s163 = scalar_select %p162, %s161, 15
          %s164 = smul.addr %s163, 8
          %s165 = scalar_lea.vmem %s0, %s164
          %s166 = smul.u32 8, %s13
        $region28: #{tpu_custom_call.1} parent=23 // pred_fallthru
          _
        // Predicated region
        $region29: #{tpu_custom_call.1} parent=23 // pred_check
          %p167 = pneg %p80
        $region30: #{tpu_custom_call.1} parent=23 // pred_check_branch
          %169 = sbr.rel (%p167) target = $region32
        $region31: #{tpu_custom_call.1} parent=23 // pred_region
          %s170 = smul.u32 8, %s13
          %p171 = scmp.lt.s32.totalorder %s170, 15
          %s172 = scalar_select %p171, %s170, 15
          %s173 = smul.addr %s172, 8
          %s174 = scalar_lea.vmem %s2, %s173
          %s175 = smul.u32 8, %s13
        $region32: #{tpu_custom_call.1} parent=23 // pred_fallthru
          _
      $region24: #{tpu_custom_call.1} parent=5 // pred_fallthru
        _
      %p176 = scmp.le.s32.totalorder 1, %s13
      %p177 = scmp.lt.s32.totalorder %s13, 3
      %p178 = pnand %p176, %p177
      %p179 = pneg %p178
      // Predicated region
      $region33: #{tpu_custom_call.1} parent=5 // pred_check
        _
      $region34: #{tpu_custom_call.1} parent=5 // pred_check_branch
        %181 = sbr.rel (%p178) target = $region36
      $region35: #{tpu_custom_call.1} parent=5 // pred_region
        %s182 = ssub.s32 %s13, 1
        %s183 = smul.u32 8, %s18
        %p184 = scmp.lt.s32.totalorder %s183, 15
        %s185 = scalar_select %p184, %s183, 15
        %s186 = smul.addr %s185, 8
        %s187 = scalar_lea.vmem %s0, %s186
        %p188 = pneg %p39
        %p189 = pneg %p36
        %p190 = pneg %p60
        %p191 = pneg %p57
        %s192 = smul.u32 8, %s18
        %p193 = scmp.lt.s32.totalorder %s192, 15
        %s194 = scalar_select %p193, %s192, 15
        %s195 = smul.addr %s194, 8
        %s196 = scalar_lea.vmem %s2, %s195
        %p197 = pneg %p86
        %p198 = pneg %p83
        %p199 = pneg %p107
        %p200 = pneg %p104
        %p201 = pneg %p133
        %p202 = pneg %p130
        %s203 = sand.u32 %s120, 1
        %s204 = scalar_lea.sflag [#allocation3], %s203
        %s205 = sand.u32 %s120, 1
        %s206 = smul.addr %s205, 16
        %s207 = scalar_lea.vmem [#allocation2], %s206
        %s208 = smul.u32 8, %s18
        %p209 = scmp.lt.s32.totalorder %s208, 15
        %s210 = scalar_select %p209, %s208, 15
        %s211 = smul.addr %s210, 8
        %s212 = scalar_lea.vmem %s0, %s211
        %s213 = smul.u32 8, %s18
        %s214 = smul.u32 8, %s18
        %p215 = scmp.lt.s32.totalorder %s214, 15
        %s216 = scalar_select %p215, %s214, 15
        %s217 = smul.addr %s216, 8
        %s218 = scalar_lea.vmem %s2, %s217
        %s219 = smul.u32 8, %s18
        %s220 = smul.u32 2, %s18
        %v223 = vld [vmem:[%s212] sm:$0xff]
        %v224 = vld [vmem:[%s212 + $0x8] sm:$0xff]
        %v225 = vld [vmem:[%s212 + $0x10] sm:$0xff]
        %v226 = vld [vmem:[%s212 + $0x18] sm:$0xff]
        %v227 = vld [vmem:[%s212 + $0x20] sm:$0xff]
        %v228 = vld [vmem:[%s212 + $0x28] sm:$0xff]
        %v229 = vld [vmem:[%s212 + $0x30] sm:$0xff]
        %v230 = vld [vmem:[%s212 + $0x38] sm:$0xff]
        %v231 = vld [vmem:[%s1] sm:$0x7]
        %v232 = vld [vmem:[%s218] sm:$0xff]
        %v233 = vld [vmem:[%s218 + $0x8] sm:$0xff]
        %v234 = vld [vmem:[%s218 + $0x10] sm:$0xff]
        %v235 = vld [vmem:[%s218 + $0x18] sm:$0xff]
        %v236 = vld [vmem:[%s218 + $0x20] sm:$0xff]
        %v237 = vld [vmem:[%s218 + $0x28] sm:$0xff]
        %v238 = vld [vmem:[%s218 + $0x30] sm:$0xff]
        %v239 = vld [vmem:[%s218 + $0x38] sm:$0xff]
        %v240 = vld [vmem:[%s3] sm:$0x1]
        %242 = vset.pattern.permute.xlu0 0
        %243 = vperm.xlu0 %242, %v223
        %v244 = vpop.permute.xlu0 %243
        %247 = vset.pattern.permute.xlu0 0
        %248 = vperm.xlu0 %247, %v224
        %v249 = vpop.permute.xlu0 %248
        %252 = vset.pattern.permute.xlu0 0
        %253 = vperm.xlu0 %252, %v225
        %v254 = vpop.permute.xlu0 %253
        %257 = vset.pattern.permute.xlu0 0
        %258 = vperm.xlu0 %257, %v226
        %v259 = vpop.permute.xlu0 %258
        %262 = vset.pattern.permute.xlu0 0
        %263 = vperm.xlu0 %262, %v227
        %v264 = vpop.permute.xlu0 %263
        %267 = vset.pattern.permute.xlu0 0
        %268 = vperm.xlu0 %267, %v228
        %v269 = vpop.permute.xlu0 %268
        %272 = vset.pattern.permute.xlu0 0
        %273 = vperm.xlu0 %272, %v229
        %v274 = vpop.permute.xlu0 %273
        %277 = vset.pattern.permute.xlu0 0
        %278 = vperm.xlu0 %277, %v230
        %v279 = vpop.permute.xlu0 %278
        %v281 = vlaneseq
        %v282 = vshrl.u32 %v281, 7
        %v283 = vsub.s32 0, %v282
        %v284 = vrot.slane %v231, %v283
        %v285 = vsub.f32 %v244, %v284
        %v286 = vsub.f32 %v249, %v284
        %v287 = vsub.f32 %v254, %v284
        %v288 = vsub.f32 %v259, %v284
        %v289 = vsub.f32 %v264, %v284
        %v290 = vsub.f32 %v269, %v284
        %v291 = vsub.f32 %v274, %v284
        %v292 = vsub.f32 %v279, %v284
        %293 = vset.pattern.permute.xlu0 1
        %294 = vperm.xlu0 %293, %v223
        %v295 = vpop.permute.xlu0 %294
        %297 = vset.pattern.permute.xlu0 1
        %298 = vperm.xlu0 %297, %v224
        %v299 = vpop.permute.xlu0 %298
        %301 = vset.pattern.permute.xlu0 1
        %302 = vperm.xlu0 %301, %v225
        %v303 = vpop.permute.xlu0 %302
        %305 = vset.pattern.permute.xlu0 1
        %306 = vperm.xlu0 %305, %v226
        %v307 = vpop.permute.xlu0 %306
        %309 = vset.pattern.permute.xlu0 1
        %310 = vperm.xlu0 %309, %v227
        %v311 = vpop.permute.xlu0 %310
        %313 = vset.pattern.permute.xlu0 1
        %314 = vperm.xlu0 %313, %v228
        %v315 = vpop.permute.xlu0 %314
        %317 = vset.pattern.permute.xlu0 1
        %318 = vperm.xlu0 %317, %v229
        %v319 = vpop.permute.xlu0 %318
        %321 = vset.pattern.permute.xlu0 1
        %322 = vperm.xlu0 %321, %v230
        %v323 = vpop.permute.xlu0 %322
        %v325 = vlaneseq
        %v326 = vshrl.u32 %v325, 7
        %v327 = vsub.s32 1, %v326
        %v328 = vrot.slane %v231, %v327
        %v329 = vsub.f32 %v295, %v328
        %v330 = vsub.f32 %v299, %v328
        %v331 = vsub.f32 %v303, %v328
        %v332 = vsub.f32 %v307, %v328
        %v333 = vsub.f32 %v311, %v328
        %v334 = vsub.f32 %v315, %v328
        %v335 = vsub.f32 %v319, %v328
        %v336 = vsub.f32 %v323, %v328
        %337 = vset.pattern.permute.xlu0 2
        %338 = vperm.xlu0 %337, %v223
        %v339 = vpop.permute.xlu0 %338
        %341 = vset.pattern.permute.xlu0 2
        %342 = vperm.xlu0 %341, %v224
        %v343 = vpop.permute.xlu0 %342
        %345 = vset.pattern.permute.xlu0 2
        %346 = vperm.xlu0 %345, %v225
        %v347 = vpop.permute.xlu0 %346
        %349 = vset.pattern.permute.xlu0 2
        %350 = vperm.xlu0 %349, %v226
        %v351 = vpop.permute.xlu0 %350
        %353 = vset.pattern.permute.xlu0 2
        %354 = vperm.xlu0 %353, %v227
        %v355 = vpop.permute.xlu0 %354
        %357 = vset.pattern.permute.xlu0 2
        %358 = vperm.xlu0 %357, %v228
        %v359 = vpop.permute.xlu0 %358
        %361 = vset.pattern.permute.xlu0 2
        %362 = vperm.xlu0 %361, %v229
        %v363 = vpop.permute.xlu0 %362
        %365 = vset.pattern.permute.xlu0 2
        %366 = vperm.xlu0 %365, %v230
        %v367 = vpop.permute.xlu0 %366
        %v369 = vlaneseq
        %v370 = vshrl.u32 %v369, 7
        %v371 = vsub.s32 2, %v370
        %v372 = vrot.slane %v231, %v371
        %v373 = vsub.f32 %v339, %v372
        %v374 = vsub.f32 %v343, %v372
        %v375 = vsub.f32 %v347, %v372
        %v376 = vsub.f32 %v351, %v372
        %v377 = vsub.f32 %v355, %v372
        %v378 = vsub.f32 %v359, %v372
        %v379 = vsub.f32 %v363, %v372
        %v380 = vsub.f32 %v367, %v372
        %v381 = vmul.f32 %v285, %v285
        %v382 = vmul.f32 %v286, %v286
        %v383 = vmul.f32 %v287, %v287
        %v384 = vmul.f32 %v288, %v288
        %v385 = vmul.f32 %v289, %v289
        %v386 = vmul.f32 %v290, %v290
        %v387 = vmul.f32 %v291, %v291
        %v388 = vmul.f32 %v292, %v292
        %v389 = vmul.f32 %v329, %v329
        %v390 = vmul.f32 %v330, %v330
        %v391 = vmul.f32 %v331, %v331
        %v392 = vmul.f32 %v332, %v332
        %v393 = vmul.f32 %v333, %v333
        %v394 = vmul.f32 %v334, %v334
        %v395 = vmul.f32 %v335, %v335
        %v396 = vmul.f32 %v336, %v336
        %v397 = vadd.f32 %v381, %v389
        %v398 = vadd.f32 %v382, %v390
        %v399 = vadd.f32 %v383, %v391
        %v400 = vadd.f32 %v384, %v392
        %v401 = vadd.f32 %v385, %v393
        %v402 = vadd.f32 %v386, %v394
        %v403 = vadd.f32 %v387, %v395
        %v404 = vadd.f32 %v388, %v396
        %v405 = vmul.f32 %v373, %v373
        %v406 = vmul.f32 %v374, %v374
        %v407 = vmul.f32 %v375, %v375
        %v408 = vmul.f32 %v376, %v376
        %v409 = vmul.f32 %v377, %v377
        %v410 = vmul.f32 %v378, %v378
        %v411 = vmul.f32 %v379, %v379
        %v412 = vmul.f32 %v380, %v380
        %v413 = vadd.f32 %v397, %v405
        %v414 = vadd.f32 %v398, %v406
        %v415 = vadd.f32 %v399, %v407
        %v416 = vadd.f32 %v400, %v408
        %v417 = vadd.f32 %v401, %v409
        %v418 = vadd.f32 %v402, %v410
        %v419 = vadd.f32 %v403, %v411
        %v420 = vadd.f32 %v404, %v412
        %421 = vset.pattern.permute.xlu0 0
        %422 = vperm.xlu0 %421, %v232
        %v423 = vpop.permute.xlu0 %422
        %424 = vset.pattern.permute.xlu0 0
        %425 = vperm.xlu0 %424, %v233
        %v426 = vpop.permute.xlu0 %425
        %427 = vset.pattern.permute.xlu0 0
        %428 = vperm.xlu0 %427, %v234
        %v429 = vpop.permute.xlu0 %428
        %430 = vset.pattern.permute.xlu0 0
        %431 = vperm.xlu0 %430, %v235
        %v432 = vpop.permute.xlu0 %431
        %433 = vset.pattern.permute.xlu0 0
        %434 = vperm.xlu0 %433, %v236
        %v435 = vpop.permute.xlu0 %434
        %436 = vset.pattern.permute.xlu0 0
        %437 = vperm.xlu0 %436, %v237
        %v438 = vpop.permute.xlu0 %437
        %439 = vset.pattern.permute.xlu0 0
        %440 = vperm.xlu0 %439, %v238
        %v441 = vpop.permute.xlu0 %440
        %442 = vset.pattern.permute.xlu0 0
        %443 = vperm.xlu0 %442, %v239
        %v444 = vpop.permute.xlu0 %443
        %v445 = vlaneseq
        %v446 = vshrl.u32 %v445, 7
        %v447 = vsub.s32 0, %v446
        %v448 = vrot.slane %v240, %v447
        %vm449 = vcmp.eq.s32.totalorder %v423, %v448
        %vm450 = vcmp.eq.s32.totalorder %v426, %v448
        %vm451 = vcmp.eq.s32.totalorder %v429, %v448
        %vm452 = vcmp.eq.s32.totalorder %v432, %v448
        %vm453 = vcmp.eq.s32.totalorder %v435, %v448
        %vm454 = vcmp.eq.s32.totalorder %v438, %v448
        %vm455 = vcmp.eq.s32.totalorder %v441, %v448
        %vm456 = vcmp.eq.s32.totalorder %v444, %v448
        %vm457 = vcmp.lt.f32.partialorder %v413, 25.0
        %vm458 = vcmp.lt.f32.partialorder %v414, 25.0
        %vm459 = vcmp.lt.f32.partialorder %v415, 25.0
        %vm460 = vcmp.lt.f32.partialorder %v416, 25.0
        %vm461 = vcmp.lt.f32.partialorder %v417, 25.0
        %vm462 = vcmp.lt.f32.partialorder %v418, 25.0
        %vm463 = vcmp.lt.f32.partialorder %v419, 25.0
        %vm464 = vcmp.lt.f32.partialorder %v420, 25.0
        %vm465 = vmand %vm449, %vm457
        %vm466 = vmand %vm450, %vm458
        %vm467 = vmand %vm451, %vm459
        %vm468 = vmand %vm452, %vm460
        %vm469 = vmand %vm453, %vm461
        %vm470 = vmand %vm454, %vm462
        %vm471 = vmand %vm455, %vm463
        %vm472 = vmand %vm456, %vm464
        %v473 = vlaneseq
        %v474 = vand.u32 %v473, 127
        %s475 = smul.u32 %s18, 64
        %v476 = vlaneseq
        %v477 = vshrl.u32 %v476, 7
        %v478 = vadd.s32 %v477, 8
        %v479 = vadd.s32 %v477, 16
        %v480 = vadd.s32 %v477, 24
        %v481 = vadd.s32 %v477, 32
        %v482 = vadd.s32 %v477, 40
        %v483 = vadd.s32 %v477, 48
        %v484 = vadd.s32 %v477, 56
        %v485 = vstv %s475
        %v486 = vadd.s32 %v477, %v485
        %v487 = vadd.s32 %v478, %v485
        %v488 = vadd.s32 %v479, %v485
        %v489 = vadd.s32 %v480, %v485
        %v490 = vadd.s32 %v481, %v485
        %v491 = vadd.s32 %v482, %v485
        %v492 = vadd.s32 %v483, %v485
        %v493 = vadd.s32 %v484, %v485
        %vm494 = vcmp.ne.s32.totalorder %v474, %v486
        %vm495 = vcmp.ne.s32.totalorder %v474, %v487
        %vm496 = vcmp.ne.s32.totalorder %v474, %v488
        %vm497 = vcmp.ne.s32.totalorder %v474, %v489
        %vm498 = vcmp.ne.s32.totalorder %v474, %v490
        %vm499 = vcmp.ne.s32.totalorder %v474, %v491
        %vm500 = vcmp.ne.s32.totalorder %v474, %v492
        %vm501 = vcmp.ne.s32.totalorder %v474, %v493
        %vm502 = vmand %vm465, %vm494
        %vm503 = vmand %vm466, %vm495
        %vm504 = vmand %vm467, %vm496
        %vm505 = vmand %vm468, %vm497
        %vm506 = vmand %vm469, %vm498
        %vm507 = vmand %vm470, %vm499
        %vm508 = vmand %vm471, %vm500
        %vm509 = vmand %vm472, %vm501
        %vm510 = vmpackc.low %vm503, %vm502
        %vm511 = vmpackc.low %vm505, %vm504
        %vm512 = vmpackc.even %vm511, %vm510
        %vm513 = vmpackc.low %vm507, %vm506
        %vm514 = vmpackc.low %vm509, %vm508
        %vm515 = vmpackc.even %vm514, %vm513
        %v516 = vsel %vm512, 16843009, 0
        %v517 = vsel %vm515, 16843009, 0
        %518 = vst [vmem:[%s207] sm:$0xff] %v516
        %519 = vst [vmem:[%s207 + $0x8] sm:$0xff] %v517
        %s520 = sand.u32 %s120, 1
        %s521 = scalar_lea.sflag [#allocation3], %s520
        %s522 = sand.u32 %s120, 1
        %s523 = smul.addr %s522, 16
        %s524 = scalar_lea.vmem [#allocation2], %s523
        // Predicated region
        $region37: #{tpu_custom_call.1} parent=35 // pred_check
          %p525 = pneg %p130
        $region38: #{tpu_custom_call.1} parent=35 // pred_check_branch
          %527 = sbr.rel (%p525) target = $region40
        $region39: #{tpu_custom_call.1} parent=35 // pred_region
          %s528 = smul.u32 2, %s18
          %s530 = ssub.s32 256, 256
          %531 = vsyncadd %s521, %s530
          %s532 = smul.addr %s528, 128
          %s533 = scalar_lea.hbm %s4, %s532
          %s534 = sshll.u32 %s524, 4
          %s535 = int_to_ptr.vmem [resolvable:$true] %s534
          %540 = dma.vmem_to_hbm [thread:$0]  %s535, 256, %s533, %s521, 128, 128, 8
        $region40: #{tpu_custom_call.1} parent=35 // pred_fallthru
          _
      $region36: #{tpu_custom_call.1} parent=5 // pred_fallthru
        _
      %p541 = scmp.le.s32.totalorder 2, %s13
      // Predicated region
      $region41: #{tpu_custom_call.1} parent=5 // pred_check
        %p542 = pneg %p541
      $region42: #{tpu_custom_call.1} parent=5 // pred_check_branch
        %544 = sbr.rel (%p542) target = $region44
      $region43: #{tpu_custom_call.1} parent=5 // pred_region
        %s545 = ssub.s32 %s13, 2
        // Predicated region
        $region45: #{tpu_custom_call.1} parent=43 // pred_check
          %p546 = pneg %p136
        $region46: #{tpu_custom_call.1} parent=43 // pred_check_branch
          %548 = sbr.rel (%p546) target = $region48
        $region47: #{tpu_custom_call.1} parent=43 // pred_region
          %s549 = sand.u32 %s121, 1
          %s550 = scalar_lea.sflag [#allocation3], %s549
          %s551 = sand.u32 %s121, 1
          %s552 = smul.addr %s551, 16
          %s553 = scalar_lea.vmem [#allocation2], %s552
          %554 = dma.done %s550, 256
        $region48: #{tpu_custom_call.1} parent=43 // pred_fallthru
          _
      $region44: #{tpu_custom_call.1} parent=5 // pred_fallthru
        _
    $region6: #{tpu_custom_call.1} parent=1 // loop_footer
      %s17 = sadd.s32 1, %s13
    $region7: #{tpu_custom_call.1} parent=1 // loop_footer_branch
      %12 = sbr.rel target = $region3
    $region8: #{tpu_custom_call.1} parent=1 // loop_exit
      _
    %555 = vsyncpa [#allocation3], 1
    %s556 = scalar_lea.sflag [#allocation3], 1
    %557 = vsyncpa %s556, 1

</llo_original>
